<compile_context>
chip_gen: v7x
topology: tpu7x:2x2x1
jax: 0.10.0
libtpu: 0.0.40
codegen_flags: <defaults>
</compile_context>

<pallas_src>
import functools

import jax
import jax.numpy as jnp
from jax.experimental import pallas as pl
from jax.experimental.pallas import tpu as pltpu


def _zparams_kernel(r_ref, wm_ref, bm_ref, wl_ref, bl_ref, mean_ref, logvar_ref):
    """One batch tile: two tiny MXU matmuls against resident weights; softplus
    applied only to the logvar head; two dense (tb, Z) stores."""
    r = r_ref[...]                                                   # (tb, R) f32

    mean = jnp.dot(r, wm_ref[...], preferred_element_type=jnp.float32) + bm_ref[...]
    pre = jnp.dot(r, wl_ref[...], preferred_element_type=jnp.float32) + bl_ref[...]

    # torch.nn.Softplus (beta=1, threshold=20): x if x > 20 else log1p(exp(x)).
    logvar = jnp.where(pre > 20.0, pre, jnp.log1p(jnp.exp(pre)))

    mean_ref[...] = mean.astype(mean_ref.dtype)
    logvar_ref[...] = logvar.astype(logvar_ref.dtype)


def _choose_batch_tile(B, R, Z, block_b=None):
    """Pick the batch tile.

    Target >= ~1 MiB of r per grid step (amortize per-step overhead), capped so
    double-buffered r plus both double-buffered outputs stay under ~12 MiB
    (fits the v5e 16 MiB scoped-VMEM default with headroom; v6e/v7x have more).
    """
    if block_b is None:
        target = (1 << 20) // max(R * 4, 1)                # rows for ~1 MiB of r
        per_row = 2 * R * 4 + 2 * (2 * Z * 4)              # dbl-buf in + 2 dbl-buf outs
        vmem_cap = (12 * 1024 * 1024) // per_row
        tb = max(8, min(target, vmem_cap))
    else:
        tb = max(8, block_b)
    if tb >= B:
        return B                                           # single full-extent block (always legal)
    return max(8, (tb // 8) * 8)                           # 8-aligned; Pallas masks the tail block


@functools.partial(jax.jit, static_argnames=("block_b",))
def zparams_forward(r, w_mean, b_mean, w_logvar, b_logvar, *, block_b=None):
    """r: (B, R); w_*: (R, Z); b_*: (Z,).  Returns ((B, Z, 1), (B, Z, 1))."""
    B, R = r.shape
    Z = w_mean.shape[1]

    bm = b_mean.reshape(1, Z).astype(jnp.float32)
    bl = b_logvar.reshape(1, Z).astype(jnp.float32)

    tb = _choose_batch_tile(B, R, Z, block_b)
    grid = (pl.cdiv(B, tb),)

    cost = pl.CostEstimate(
        flops=2 * B * R * (2 * Z),
        transcendentals=2 * B * Z,                         # exp + log1p on the logvar head
        bytes_accessed=(B * R * 4                          # r read
                        + 2 * R * Z * 4 + 2 * Z * 4        # weights + biases (resident)
                        + 2 * B * Z * 4),                  # two outputs
    )

    out_mean, out_logvar = pl.pallas_call(
        _zparams_kernel,
        out_shape=(jax.ShapeDtypeStruct((B, Z), jnp.float32),
                   jax.ShapeDtypeStruct((B, Z), jnp.float32)),
        grid=grid,
        in_specs=[
            pl.BlockSpec((tb, R), lambda i: (i, 0)),       # r tile (pipelined over batch)
            pl.BlockSpec((R, Z), lambda i: (0, 0)),        # w_mean  (resident)
            pl.BlockSpec((1, Z), lambda i: (0, 0)),        # b_mean  (resident)
            pl.BlockSpec((R, Z), lambda i: (0, 0)),        # w_logvar (resident)
            pl.BlockSpec((1, Z), lambda i: (0, 0)),        # b_logvar (resident)
        ],
        out_specs=(pl.BlockSpec((tb, Z), lambda i: (i, 0)),
                   pl.BlockSpec((tb, Z), lambda i: (i, 0))),
        compiler_params=pltpu.CompilerParams(
            dimension_semantics=("parallel",),
            vmem_limit_bytes=32 * 1024 * 1024,
        ),
        cost_estimate=cost,
    )(r, w_mean, bm, w_logvar, bl)

    # unsqueeze(-1): pure metadata reshape, no extra HBM pass.
    return out_mean[..., None], out_logvar[..., None]


def _init_linear_params(key, in_features, out_features):
    """Deterministic init mirroring torch.nn.Linear defaults (uniform +-1/sqrt(in)).
    Weights are stored (in_features, out_features) so the kernel computes r @ W."""
    k_w, k_b = jax.random.split(key)
    bound = 1.0 / jnp.sqrt(float(in_features))
    w = jax.random.uniform(k_w, (in_features, out_features),
                           minval=-bound, maxval=bound, dtype=jnp.float32)
    bias = jax.random.uniform(k_b, (out_features,),
                              minval=-bound, maxval=bound, dtype=jnp.float32)
    return w, bias


def _reference(r, w_mean, b_mean, w_logvar, b_logvar):
    hi = jax.lax.Precision.HIGHEST
    ref_mean = (jnp.dot(r, w_mean, precision=hi) + b_mean)[..., None]
    pre = jnp.dot(r, w_logvar, precision=hi) + b_logvar
    ref_logvar = jnp.where(pre > 20.0, pre, jnp.log1p(jnp.exp(pre)))[..., None]
    return ref_mean, ref_logvar


if __name__ == "__main__":
    # Full-f32 matmul precision for both the reference and the kernel trace so
    # the small-shape numerical check is meaningful.
    jax.config.update("jax_default_matmul_precision", "highest")

    key = jax.random.PRNGKey(0)
    k_r, k_mean, k_logvar, k_r2 = jax.random.split(key, 4)

    B = 8        # batch
    R_DIM = 32   # r_dim
    Z_DIM = 16   # z_dim

    r = jax.random.normal(k_r, (B, R_DIM), dtype=jnp.float32)
    w_mean, b_mean = _init_linear_params(k_mean, R_DIM, Z_DIM)
    w_logvar, b_logvar = _init_linear_params(k_logvar, R_DIM, Z_DIM)

    # Small-batch path: single full-extent block.
    z_mean, z_logvar = zparams_forward(r, w_mean, b_mean, w_logvar, b_logvar)
    jax.block_until_ready((z_mean, z_logvar))

    ref_mean, ref_logvar = _reference(r, w_mean, b_mean, w_logvar, b_logvar)
    assert z_mean.shape == (B, Z_DIM, 1)
    assert z_logvar.shape == (B, Z_DIM, 1)
    assert jnp.allclose(z_mean, ref_mean, atol=1e-4, rtol=1e-4)
    assert jnp.allclose(z_logvar, ref_logvar, atol=1e-4, rtol=1e-4)

    # Uneven-batch path: B not a multiple of the tile, no wrapper padding —
    # grid = cdiv(20, 8) = 3 with a masked partial tail block.
    B2 = 20
    r2 = jax.random.normal(k_r2, (B2, R_DIM), dtype=jnp.float32)
    z_mean2, z_logvar2 = zparams_forward(r2, w_mean, b_mean, w_logvar, b_logvar,
                                         block_b=8)
    jax.block_until_ready((z_mean2, z_logvar2))

    ref_mean2, ref_logvar2 = _reference(r2, w_mean, b_mean, w_logvar, b_logvar)
    assert z_mean2.shape == (B2, Z_DIM, 1)
    assert z_logvar2.shape == (B2, Z_DIM, 1)
    assert jnp.allclose(z_mean2, ref_mean2, atol=1e-4, rtol=1e-4)
    assert jnp.allclose(z_logvar2, ref_logvar2, atol=1e-4, rtol=1e-4)

    print("KERNEL_OK")
</pallas_src>

<mosaic_0001>
module attributes {stable_mosaic.version = 11 : i64} {
  func.func @_zparams_kernel(%arg0: i32, %arg1: memref<8x32xf32, #tpu.memory_space<vmem>>, %arg2: memref<32x16xf32, #tpu.memory_space<vmem>>, %arg3: memref<1x16xf32, #tpu.memory_space<vmem>>, %arg4: memref<32x16xf32, #tpu.memory_space<vmem>>, %arg5: memref<1x16xf32, #tpu.memory_space<vmem>>, %arg6: memref<8x16xf32, #tpu.memory_space<vmem>>, %arg7: memref<8x16xf32, #tpu.memory_space<vmem>>) attributes {dimension_semantics = [#tpu.dimension_semantics<parallel>], iteration_bounds = array<i64: 1>, scalar_prefetch = 0 : i64, scratch_operands = 0 : i64, tpu.core_type = #tpu.core_type<tc>, window_params = [{transform_indices = @transform_0, window_bounds = array<i64: 8, 32>}, {pipeline_mode = #tpu.pipeline_mode<synchronous>, transform_indices = @transform_1, window_bounds = array<i64: 32, 16>}, {pipeline_mode = #tpu.pipeline_mode<synchronous>, transform_indices = @transform_2, window_bounds = array<i64: 1, 16>}, {pipeline_mode = #tpu.pipeline_mode<synchronous>, transform_indices = @transform_3, window_bounds = array<i64: 32, 16>}, {pipeline_mode = #tpu.pipeline_mode<synchronous>, transform_indices = @transform_4, window_bounds = array<i64: 1, 16>}, {transform_indices = @transform_5, window_bounds = array<i64: 8, 16>}, {transform_indices = @transform_6, window_bounds = array<i64: 8, 16>}]} {
    %c0 = arith.constant 0 : index
    %c0_0 = arith.constant 0 : index
    %0 = vector.load %arg1[%c0, %c0_0] : memref<8x32xf32, #tpu.memory_space<vmem>>, vector<8x32xf32>
    %c0_1 = arith.constant 0 : index
    %c0_2 = arith.constant 0 : index
    %1 = vector.load %arg2[%c0_1, %c0_2] : memref<32x16xf32, #tpu.memory_space<vmem>>, vector<32x16xf32>
    %cst = arith.constant dense<0.000000e+00> : vector<8x16xf32>
    %2 = tpu.matmul %0, %1, %cst {dimension_numbers = #tpu.dot_dimension_numbers<[1], [0], [0], [1], [0, 0, 1, 1], [], []>, precision = #tpu.contract_precision<fp32>} : vector<8x32xf32>, vector<32x16xf32>, vector<8x16xf32> -> vector<8x16xf32>
    %c0_3 = arith.constant 0 : index
    %c0_4 = arith.constant 0 : index
    %3 = vector.load %arg3[%c0_3, %c0_4] : memref<1x16xf32, #tpu.memory_space<vmem>>, vector<1x16xf32>
    %4 = vector.broadcast %3 : vector<1x16xf32> to vector<8x16xf32>
    %5 = arith.addf %2, %4 : vector<8x16xf32>
    %c0_5 = arith.constant 0 : index
    %c0_6 = arith.constant 0 : index
    %6 = vector.load %arg4[%c0_5, %c0_6] : memref<32x16xf32, #tpu.memory_space<vmem>>, vector<32x16xf32>
    %cst_7 = arith.constant dense<0.000000e+00> : vector<8x16xf32>
    %7 = tpu.matmul %0, %6, %cst_7 {dimension_numbers = #tpu.dot_dimension_numbers<[1], [0], [0], [1], [0, 0, 1, 1], [], []>, precision = #tpu.contract_precision<fp32>} : vector<8x32xf32>, vector<32x16xf32>, vector<8x16xf32> -> vector<8x16xf32>
    %c0_8 = arith.constant 0 : index
    %c0_9 = arith.constant 0 : index
    %8 = vector.load %arg5[%c0_8, %c0_9] : memref<1x16xf32, #tpu.memory_space<vmem>>, vector<1x16xf32>
    %9 = vector.broadcast %8 : vector<1x16xf32> to vector<8x16xf32>
    %10 = arith.addf %7, %9 : vector<8x16xf32>
    %cst_10 = arith.constant 2.000000e+01 : f32
    %11 = vector.broadcast %cst_10 : f32 to vector<8x16xf32>
    %12 = arith.cmpf ogt, %10, %11 : vector<8x16xf32>
    %13 = math.exp %10 : vector<8x16xf32>
    %14 = math.log1p %13 : vector<8x16xf32>
    %15 = arith.select %12, %10, %14 : vector<8x16xi1>, vector<8x16xf32>
    %c0_11 = arith.constant 0 : index
    %c0_12 = arith.constant 0 : index
    %16 = vector.load %arg6[%c0_11, %c0_12] : memref<8x16xf32, #tpu.memory_space<vmem>>, vector<8x16xf32>
    tpu.vector_store %arg6[%c0_11, %c0_12], %5 {strides = array<i32>} : memref<8x16xf32, #tpu.memory_space<vmem>>, vector<8x16xf32>,
    %c0_13 = arith.constant 0 : index
    %c0_14 = arith.constant 0 : index
    %17 = vector.load %arg7[%c0_13, %c0_14] : memref<8x16xf32, #tpu.memory_space<vmem>>, vector<8x16xf32>
    tpu.vector_store %arg7[%c0_13, %c0_14], %15 {strides = array<i32>} : memref<8x16xf32, #tpu.memory_space<vmem>>, vector<8x16xf32>,
    return
  }
  func.func @transform_0(%arg0: i32) -> (i32, i32) {
    %c0_i32 = arith.constant 0 : i32
    %c0_i32_0 = arith.constant 0 : i32
    return %arg0, %c0_i32 : i32, i32
  }
  func.func @transform_1(%arg0: i32) -> (i32, i32) {
    %c0_i32 = arith.constant 0 : i32
    %c0_i32_0 = arith.constant 0 : i32
    %c0_i32_1 = arith.constant 0 : i32
    return %c0_i32, %c0_i32_0 : i32, i32
  }
  func.func @transform_2(%arg0: i32) -> (i32, i32) {
    %c0_i32 = arith.constant 0 : i32
    %c0_i32_0 = arith.constant 0 : i32
    %c0_i32_1 = arith.constant 0 : i32
    return %c0_i32, %c0_i32_0 : i32, i32
  }
  func.func @transform_3(%arg0: i32) -> (i32, i32) {
    %c0_i32 = arith.constant 0 : i32
    %c0_i32_0 = arith.constant 0 : i32
    %c0_i32_1 = arith.constant 0 : i32
    return %c0_i32, %c0_i32_0 : i32, i32
  }
  func.func @transform_4(%arg0: i32) -> (i32, i32) {
    %c0_i32 = arith.constant 0 : i32
    %c0_i32_0 = arith.constant 0 : i32
    %c0_i32_1 = arith.constant 0 : i32
    return %c0_i32, %c0_i32_0 : i32, i32
  }
  func.func @transform_5(%arg0: i32) -> (i32, i32) {
    %c0_i32 = arith.constant 0 : i32
    %c0_i32_0 = arith.constant 0 : i32
    return %arg0, %c0_i32 : i32, i32
  }
  func.func @transform_6(%arg0: i32) -> (i32, i32) {
    %c0_i32 = arith.constant 0 : i32
    %c0_i32_0 = arith.constant 0 : i32
    return %arg0, %c0_i32 : i32, i32
  }
}

</mosaic_0001>

<llo_original>
// kernel: zparams_forward.1
$region0: #{zparams_forward.1}
  #allocation0 [shape = 'u32[]', space=smem, size = 0x4, offset = 0x4, fixed_abs, tag = 'smem constant byte address 0x4 - core index']
  #allocation1 [shape = 'u32[144,128]{1,0:T(1,128)}', space=vmem, size = 0x12000, scoped, tag = 'internal scratch']
  %s0 = inlined_call_operand.vmem [shape: f32[8,32], index: 0, kind: input, shape index: {}]
  %s1 = inlined_call_operand.vmem [shape: f32[32,16], index: 1, kind: input, shape index: {}]
  %s2 = inlined_call_operand.vmem [shape: f32[1,16], index: 2, kind: input, shape index: {}]
  %s3 = inlined_call_operand.vmem [shape: f32[32,16], index: 3, kind: input, shape index: {}]
  %s4 = inlined_call_operand.vmem [shape: f32[1,16], index: 4, kind: input, shape index: {}]
  %s5 = inlined_call_operand.hbm [shape: f32[8,16], index: 5, kind: output, shape index: {0}]
  %s6 = inlined_call_operand.hbm [shape: f32[8,16], index: 6, kind: output, shape index: {1}]
  %7 = xla_tuple %s5, %s6
  %s8 = sld [smem:[#allocation0]]
  $region38: #{zparams_forward.1} parent=0
    _
  %s10 = ssub.s32 1, %s8
  %s11 = scalar_select 0, %s10, %s8
  $region1: #{zparams_forward.1} parent=0
    #allocation2 [shape = 'u8[4096]{0}', space=vmem, size = 0x1000, scoped, tag = 'output window, operand 0, single buffered']
    #allocation3 [shape = 's32[1]{0}', space=sflag, size = 0x4, scoped, tag = 'scoped memory for zparams_forward.1']
    #allocation4 [shape = 'u8[4096]{0}', space=vmem, size = 0x1000, scoped, tag = 'output window, operand 1, single buffered']
    #allocation5 [shape = 's32[1]{0}', space=sflag, size = 0x4, scoped, tag = 'scoped memory for zparams_forward.1']
    %12 = vsyncpa [#allocation3], 0
    %13 = vsyncpa [#allocation5], 0
    // Predicated region
    $region2: #{zparams_forward.1} parent=1 // pred_check
      _
    $region3: #{zparams_forward.1} parent=1 // pred_check_branch
      %15 = sbr.rel (0) target = $region5
    $region4: #{zparams_forward.1} parent=1 // pred_region
      _
    $region5: #{zparams_forward.1} parent=1 // pred_fallthru
      _
    // Predicated region
    $region6: #{zparams_forward.1} parent=1 // pred_check
      _
    $region7: #{zparams_forward.1} parent=1 // pred_check_branch
      %17 = sbr.rel (0) target = $region9
    $region8: #{zparams_forward.1} parent=1 // pred_region
      _
    $region9: #{zparams_forward.1} parent=1 // pred_fallthru
      _
    // Predicated region
    $region10: #{zparams_forward.1} parent=1 // pred_check
      _
    $region11: #{zparams_forward.1} parent=1 // pred_check_branch
      %19 = sbr.rel (0) target = $region13
    $region12: #{zparams_forward.1} parent=1 // pred_region
      _
    $region13: #{zparams_forward.1} parent=1 // pred_fallthru
      _
    // Predicated region
    $region14: #{zparams_forward.1} parent=1 // pred_check
      _
    $region15: #{zparams_forward.1} parent=1 // pred_check_branch
      %21 = sbr.rel (0) target = $region17
    $region16: #{zparams_forward.1} parent=1 // pred_region
      _
    $region17: #{zparams_forward.1} parent=1 // pred_fallthru
      _
    // Predicated region
    $region18: #{zparams_forward.1} parent=1 // pred_check
      _
    $region19: #{zparams_forward.1} parent=1 // pred_check_branch
      %23 = sbr.rel (0) target = $region21
    $region20: #{zparams_forward.1} parent=1 // pred_region
      _
    $region21: #{zparams_forward.1} parent=1 // pred_fallthru
      _
    %v24 = vld [vmem:[%s0] sm:$0xff]
    %v25 = vld [vmem:[%s1] sm:$0xff]
    %v26 = vld [vmem:[%s1 + $0x8] sm:$0xff]
    %v27 = vld [vmem:[%s1 + $0x10] sm:$0xff]
    %v28 = vld [vmem:[%s1 + $0x18] sm:$0xff]
    %v29 = vld [vmem:[%s2] sm:$0x1]
    %v31 = vlaneseq
    %v32 = vshrl.u32 %v31, 7
    %v33 = vsub.s32 0, %v32
    %v34 = vrot.slane %v29, %v33
    %vm36 = vcmask 261120
    %v38 = vsel %vm36, %v24, 0
    %40 = vmatprep.subr.mxu0 0.0
    %v41 = vand.u32 %v25, 4294901760
    %42 = vmatpush1.msra.mxu0 %v41
    %43 = vmatprep.subr.mxu0 0.0
    %v44 = vand.u32 %v26, 4294901760
    %45 = vmatpush1.msra.mxu0 %v44
    %46 = vmatprep.subr.mxu0 0.0
    %v47 = vand.u32 %v27, 4294901760
    %48 = vmatpush1.msra.mxu0 %v47
    %49 = vmatprep.subr.mxu0 0.0
    %v50 = vand.u32 %v28, 4294901760
    %51 = vmatpush1.msra.mxu0 %v50
    %52 = vmatprep.subr.mxu0 0.0
    %53 = vmatpush1.msra.mxu0 0.0
    %54 = vmatprep.subr.mxu0 0.0
    %55 = vmatpush1.msra.mxu0 0.0
    %56 = vmatprep.subr.mxu0 0.0
    %57 = vmatpush1.msra.mxu0 0.0
    %58 = vmatprep.subr.mxu0 0.0
    %59 = vmatpush1.msra.mxu0 0.0
    %60 = vmatprep.subr.mxu0 0.0
    %61 = vmatpush1.msra.mxu0 0.0
    %62 = vmatprep.subr.mxu0 0.0
    %63 = vmatpush1.msra.mxu0 0.0
    %64 = vmatprep.subr.mxu0 0.0
    %65 = vmatpush1.msra.mxu0 0.0
    %66 = vmatprep.subr.mxu0 0.0
    %67 = vmatpush1.msra.mxu0 0.0
    %68 = vmatprep.subr.mxu0 0.0
    %69 = vmatpush1.msra.mxu0 0.0
    %70 = vmatprep.subr.mxu0 0.0
    %71 = vmatpush1.msra.mxu0 0.0
    %72 = vmatprep.subr.mxu0 0.0
    %73 = vmatpush1.msra.mxu0 0.0
    %74 = vmatprep.subr.mxu0 0.0
    %75 = vmatpush1.msra.mxu0 0.0
    %76 = vmatprep.subr.mxu0 0.0
    %77 = vmatpush1.msra.mxu0 0.0
    %78 = vmatprep.subr.mxu0 0.0
    %79 = vmatpush1.msra.mxu0 0.0
    %80 = vmatprep.subr.mxu0 0.0
    %81 = vmatpush1.msra.mxu0 0.0
    %82 = vmatprep.subr.mxu0 0.0
    %83 = vmatpush1.msra.mxu0 0.0
    %84 = vmatprep.subr.mxu0 0.0
    %85 = vmatpush1.msra.mxu0 0.0
    %86 = vmatprep.subr.mxu0 0.0
    %87 = vmatpush1.msra.mxu0 0.0
    %88 = vmatprep.subr.mxu0 0.0
    %89 = vmatpush1.msra.mxu0 0.0
    %90 = vmatprep.subr.mxu0 0.0
    %91 = vmatpush1.msra.mxu0 0.0
    %92 = vmatprep.subr.mxu0 0.0
    %93 = vmatpush1.msra.mxu0 0.0
    %94 = vmatprep.subr.mxu0 0.0
    %95 = vmatpush1.msra.mxu0 0.0
    %96 = vmatprep.subr.mxu0 0.0
    %97 = vmatpush1.msra.mxu0 0.0
    %98 = vmatprep.subr.mxu0 0.0
    %99 = vmatpush1.msra.mxu0 0.0
    %100 = vmatprep.subr.mxu0 0.0
    %101 = vmatpush1.msra.mxu0 0.0
    %102 = vmatprep.subr.mxu0 0.0
    %103 = vmatpush1.msra.mxu0 0.0
    %104 = vmatprep.subr.mxu0 0.0
    %105 = vmatpush1.msra.mxu0 0.0
    %106 = vmatprep.subr.mxu0 0.0
    %107 = vmatpush1.msra.mxu0 0.0
    %108 = vmatprep.mubr.f32.mxu0 0.0
    %v109 = vand.u32 %v38, 4294901760
    %v110 = vsub.f32 %v38, %v109
    %v111 = vand.u32 %v110, 4294901760
    %v112 = vsub.f32 %v110, %v111
    %v113 = vand.u32 %v112, 4294901760
    %114 = vmatmul.mubr.f32.gmra.mrb[0].mxu0 %v113
    %v115 = vpop.f32.mrb[0].mxu0
    %v116 = vadd.f32 %v34, %v115
    %v117 = vpop.f32.mrb[0].mxu0
    %118 = vdwg.mxu0
    %119 = vmatprep.subr.mxu0 0.0
    %v120 = vand.u32 %v25, 4294901760
    %v121 = vsub.f32 %v25, %v120
    %v122 = vand.u32 %v121, 4294901760
    %v123 = vsub.f32 %v121, %v122
    %v124 = vand.u32 %v123, 4294901760
    %125 = vmatpush1.msra.mxu0 %v124
    %126 = vmatprep.subr.mxu0 0.0
    %v127 = vand.u32 %v26, 4294901760
    %v128 = vsub.f32 %v26, %v127
    %v129 = vand.u32 %v128, 4294901760
    %v130 = vsub.f32 %v128, %v129
    %v131 = vand.u32 %v130, 4294901760
    %132 = vmatpush1.msra.mxu0 %v131
    %133 = vmatprep.subr.mxu0 0.0
    %v134 = vand.u32 %v27, 4294901760
    %v135 = vsub.f32 %v27, %v134
    %v136 = vand.u32 %v135, 4294901760
    %v137 = vsub.f32 %v135, %v136
    %v138 = vand.u32 %v137, 4294901760
    %139 = vmatpush1.msra.mxu0 %v138
    %140 = vmatprep.subr.mxu0 0.0
    %v141 = vand.u32 %v28, 4294901760
    %v142 = vsub.f32 %v28, %v141
    %v143 = vand.u32 %v142, 4294901760
    %v144 = vsub.f32 %v142, %v143
    %v145 = vand.u32 %v144, 4294901760
    %146 = vmatpush1.msra.mxu0 %v145
    %147 = vmatprep.subr.mxu0 0.0
    %148 = vmatpush1.msra.mxu0 0.0
    %149 = vmatprep.subr.mxu0 0.0
    %150 = vmatpush1.msra.mxu0 0.0
    %151 = vmatprep.subr.mxu0 0.0
    %152 = vmatpush1.msra.mxu0 0.0
    %153 = vmatprep.subr.mxu0 0.0
    %154 = vmatpush1.msra.mxu0 0.0
    %155 = vmatprep.subr.mxu0 0.0
    %156 = vmatpush1.msra.mxu0 0.0
    %157 = vmatprep.subr.mxu0 0.0
    %158 = vmatpush1.msra.mxu0 0.0
    %159 = vmatprep.subr.mxu0 0.0
    %160 = vmatpush1.msra.mxu0 0.0
    %161 = vmatprep.subr.mxu0 0.0
    %162 = vmatpush1.msra.mxu0 0.0
    %163 = vmatprep.subr.mxu0 0.0
    %164 = vmatpush1.msra.mxu0 0.0
    %165 = vmatprep.subr.mxu0 0.0
    %166 = vmatpush1.msra.mxu0 0.0
    %167 = vmatprep.subr.mxu0 0.0
    %168 = vmatpush1.msra.mxu0 0.0
    %169 = vmatprep.subr.mxu0 0.0
    %170 = vmatpush1.msra.mxu0 0.0
    %171 = vmatprep.subr.mxu0 0.0
    %172 = vmatpush1.msra.mxu0 0.0
    %173 = vmatprep.subr.mxu0 0.0
    %174 = vmatpush1.msra.mxu0 0.0
    %175 = vmatprep.subr.mxu0 0.0
    %176 = vmatpush1.msra.mxu0 0.0
    %177 = vmatprep.subr.mxu0 0.0
    %178 = vmatpush1.msra.mxu0 0.0
    %179 = vmatprep.subr.mxu0 0.0
    %180 = vmatpush1.msra.mxu0 0.0
    %181 = vmatprep.subr.mxu0 0.0
    %182 = vmatpush1.msra.mxu0 0.0
    %183 = vmatprep.subr.mxu0 0.0
    %184 = vmatpush1.msra.mxu0 0.0
    %185 = vmatprep.subr.mxu0 0.0
    %186 = vmatpush1.msra.mxu0 0.0
    %187 = vmatprep.subr.mxu0 0.0
    %188 = vmatpush1.msra.mxu0 0.0
    %189 = vmatprep.subr.mxu0 0.0
    %190 = vmatpush1.msra.mxu0 0.0
    %191 = vmatprep.subr.mxu0 0.0
    %192 = vmatpush1.msra.mxu0 0.0
    %193 = vmatprep.subr.mxu0 0.0
    %194 = vmatpush1.msra.mxu0 0.0
    %195 = vmatprep.subr.mxu0 0.0
    %196 = vmatpush1.msra.mxu0 0.0
    %197 = vmatprep.subr.mxu0 0.0
    %198 = vmatpush1.msra.mxu0 0.0
    %199 = vmatprep.subr.mxu0 0.0
    %200 = vmatpush1.msra.mxu0 0.0
    %201 = vmatprep.subr.mxu0 0.0
    %202 = vmatpush1.msra.mxu0 0.0
    %203 = vmatprep.mubr.f32.mxu0 0.0
    %v204 = vand.u32 %v38, 4294901760
    %205 = vmatmul.mubr.f32.gmra.mrb[0].mxu0 %v204
    %v206 = vpop.f32.mrb[0].mxu0
    %v207 = vadd.f32 %v116, %v206
    %v208 = vpop.f32.mrb[0].mxu0
    %209 = vdwg.mxu0
    %210 = vmatprep.subr.mxu0 0.0
    %v211 = vand.u32 %v25, 4294901760
    %v212 = vsub.f32 %v25, %v211
    %213 = vmatpush1.msra.mxu0 %v212
    %214 = vmatprep.subr.mxu0 0.0
    %v215 = vand.u32 %v26, 4294901760
    %v216 = vsub.f32 %v26, %v215
    %217 = vmatpush1.msra.mxu0 %v216
    %218 = vmatprep.subr.mxu0 0.0
    %v219 = vand.u32 %v27, 4294901760
    %v220 = vsub.f32 %v27, %v219
    %221 = vmatpush1.msra.mxu0 %v220
    %222 = vmatprep.subr.mxu0 0.0
    %v223 = vand.u32 %v28, 4294901760
    %v224 = vsub.f32 %v28, %v223
    %225 = vmatpush1.msra.mxu0 %v224
    %226 = vmatprep.subr.mxu0 0.0
    %227 = vmatpush1.msra.mxu0 0.0
    %228 = vmatprep.subr.mxu0 0.0
    %229 = vmatpush1.msra.mxu0 0.0
    %230 = vmatprep.subr.mxu0 0.0
    %231 = vmatpush1.msra.mxu0 0.0
    %232 = vmatprep.subr.mxu0 0.0
    %233 = vmatpush1.msra.mxu0 0.0
    %234 = vmatprep.subr.mxu0 0.0
    %235 = vmatpush1.msra.mxu0 0.0
    %236 = vmatprep.subr.mxu0 0.0
    %237 = vmatpush1.msra.mxu0 0.0
    %238 = vmatprep.subr.mxu0 0.0
    %239 = vmatpush1.msra.mxu0 0.0
    %240 = vmatprep.subr.mxu0 0.0
    %241 = vmatpush1.msra.mxu0 0.0
    %242 = vmatprep.subr.mxu0 0.0
    %243 = vmatpush1.msra.mxu0 0.0
    %244 = vmatprep.subr.mxu0 0.0
    %245 = vmatpush1.msra.mxu0 0.0
    %246 = vmatprep.subr.mxu0 0.0
    %247 = vmatpush1.msra.mxu0 0.0
    %248 = vmatprep.subr.mxu0 0.0
    %249 = vmatpush1.msra.mxu0 0.0
    %250 = vmatprep.subr.mxu0 0.0
    %251 = vmatpush1.msra.mxu0 0.0
    %252 = vmatprep.subr.mxu0 0.0
    %253 = vmatpush1.msra.mxu0 0.0
    %254 = vmatprep.subr.mxu0 0.0
    %255 = vmatpush1.msra.mxu0 0.0
    %256 = vmatprep.subr.mxu0 0.0
    %257 = vmatpush1.msra.mxu0 0.0
    %258 = vmatprep.subr.mxu0 0.0
    %259 = vmatpush1.msra.mxu0 0.0
    %260 = vmatprep.subr.mxu0 0.0
    %261 = vmatpush1.msra.mxu0 0.0
    %262 = vmatprep.subr.mxu0 0.0
    %263 = vmatpush1.msra.mxu0 0.0
    %264 = vmatprep.subr.mxu0 0.0
    %265 = vmatpush1.msra.mxu0 0.0
    %266 = vmatprep.subr.mxu0 0.0
    %267 = vmatpush1.msra.mxu0 0.0
    %268 = vmatprep.subr.mxu0 0.0
    %269 = vmatpush1.msra.mxu0 0.0
    %270 = vmatprep.subr.mxu0 0.0
    %271 = vmatpush1.msra.mxu0 0.0
    %272 = vmatprep.subr.mxu0 0.0
    %273 = vmatpush1.msra.mxu0 0.0
    %274 = vmatprep.subr.mxu0 0.0
    %275 = vmatpush1.msra.mxu0 0.0
    %276 = vmatprep.subr.mxu0 0.0
    %277 = vmatpush1.msra.mxu0 0.0
    %278 = vmatprep.subr.mxu0 0.0
    %279 = vmatpush1.msra.mxu0 0.0
    %280 = vmatprep.subr.mxu0 0.0
    %281 = vmatpush1.msra.mxu0 0.0
    %282 = vmatprep.mubr.f32.mxu0 0.0
    %v283 = vand.u32 %v38, 4294901760
    %v284 = vsub.f32 %v38, %v283
    %285 = vmatmul.mubr.f32.gmra.mrb[0].mxu0 %v284
    %v286 = vpop.f32.mrb[0].mxu0
    %v287 = vadd.f32 %v207, %v286
    %v288 = vpop.f32.mrb[0].mxu0
    %289 = vdwg.mxu0
    %290 = vmatprep.subr.mxu0 0.0
    %v291 = vand.u32 %v25, 4294901760
    %292 = vmatpush1.msra.mxu0 %v291
    %293 = vmatprep.subr.mxu0 0.0
    %v294 = vand.u32 %v26, 4294901760
    %295 = vmatpush1.msra.mxu0 %v294
    %296 = vmatprep.subr.mxu0 0.0
    %v297 = vand.u32 %v27, 4294901760
    %298 = vmatpush1.msra.mxu0 %v297
    %299 = vmatprep.subr.mxu0 0.0
    %v300 = vand.u32 %v28, 4294901760
    %301 = vmatpush1.msra.mxu0 %v300
    %302 = vmatprep.subr.mxu0 0.0
    %303 = vmatpush1.msra.mxu0 0.0
    %304 = vmatprep.subr.mxu0 0.0
    %305 = vmatpush1.msra.mxu0 0.0
    %306 = vmatprep.subr.mxu0 0.0
    %307 = vmatpush1.msra.mxu0 0.0
    %308 = vmatprep.subr.mxu0 0.0
    %309 = vmatpush1.msra.mxu0 0.0
    %310 = vmatprep.subr.mxu0 0.0
    %311 = vmatpush1.msra.mxu0 0.0
    %312 = vmatprep.subr.mxu0 0.0
    %313 = vmatpush1.msra.mxu0 0.0
    %314 = vmatprep.subr.mxu0 0.0
    %315 = vmatpush1.msra.mxu0 0.0
    %316 = vmatprep.subr.mxu0 0.0
    %317 = vmatpush1.msra.mxu0 0.0
    %318 = vmatprep.subr.mxu0 0.0
    %319 = vmatpush1.msra.mxu0 0.0
    %320 = vmatprep.subr.mxu0 0.0
    %321 = vmatpush1.msra.mxu0 0.0
    %322 = vmatprep.subr.mxu0 0.0
    %323 = vmatpush1.msra.mxu0 0.0
    %324 = vmatprep.subr.mxu0 0.0
    %325 = vmatpush1.msra.mxu0 0.0
    %326 = vmatprep.subr.mxu0 0.0
    %327 = vmatpush1.msra.mxu0 0.0
    %328 = vmatprep.subr.mxu0 0.0
    %329 = vmatpush1.msra.mxu0 0.0
    %330 = vmatprep.subr.mxu0 0.0
    %331 = vmatpush1.msra.mxu0 0.0
    %332 = vmatprep.subr.mxu0 0.0
    %333 = vmatpush1.msra.mxu0 0.0
    %334 = vmatprep.subr.mxu0 0.0
    %335 = vmatpush1.msra.mxu0 0.0
    %336 = vmatprep.subr.mxu0 0.0
    %337 = vmatpush1.msra.mxu0 0.0
    %338 = vmatprep.subr.mxu0 0.0
    %339 = vmatpush1.msra.mxu0 0.0
    %340 = vmatprep.subr.mxu0 0.0
    %341 = vmatpush1.msra.mxu0 0.0
    %342 = vmatprep.subr.mxu0 0.0
    %343 = vmatpush1.msra.mxu0 0.0
    %344 = vmatprep.subr.mxu0 0.0
    %345 = vmatpush1.msra.mxu0 0.0
    %346 = vmatprep.subr.mxu0 0.0
    %347 = vmatpush1.msra.mxu0 0.0
    %348 = vmatprep.subr.mxu0 0.0
    %349 = vmatpush1.msra.mxu0 0.0
    %350 = vmatprep.subr.mxu0 0.0
    %351 = vmatpush1.msra.mxu0 0.0
    %352 = vmatprep.subr.mxu0 0.0
    %353 = vmatpush1.msra.mxu0 0.0
    %354 = vmatprep.subr.mxu0 0.0
    %355 = vmatpush1.msra.mxu0 0.0
    %356 = vmatprep.subr.mxu0 0.0
    %357 = vmatpush1.msra.mxu0 0.0
    %358 = vmatprep.mubr.f32.mxu0 0.0
    %v359 = vand.u32 %v38, 4294901760
    %v360 = vsub.f32 %v38, %v359
    %v361 = vand.u32 %v360, 4294901760
    %362 = vmatmul.mubr.f32.gmra.mrb[0].mxu0 %v361
    %v363 = vpop.f32.mrb[0].mxu0
    %v364 = vadd.f32 %v287, %v363
    %v365 = vpop.f32.mrb[0].mxu0
    %366 = vdwg.mxu0
    %367 = vmatprep.subr.mxu0 0.0
    %v368 = vand.u32 %v25, 4294901760
    %v369 = vsub.f32 %v25, %v368
    %v370 = vand.u32 %v369, 4294901760
    %371 = vmatpush1.msra.mxu0 %v370
    %372 = vmatprep.subr.mxu0 0.0
    %v373 = vand.u32 %v26, 4294901760
    %v374 = vsub.f32 %v26, %v373
    %v375 = vand.u32 %v374, 4294901760
    %376 = vmatpush1.msra.mxu0 %v375
    %377 = vmatprep.subr.mxu0 0.0
    %v378 = vand.u32 %v27, 4294901760
    %v379 = vsub.f32 %v27, %v378
    %v380 = vand.u32 %v379, 4294901760
    %381 = vmatpush1.msra.mxu0 %v380
    %382 = vmatprep.subr.mxu0 0.0
    %v383 = vand.u32 %v28, 4294901760
    %v384 = vsub.f32 %v28, %v383
    %v385 = vand.u32 %v384, 4294901760
    %386 = vmatpush1.msra.mxu0 %v385
    %387 = vmatprep.subr.mxu0 0.0
    %388 = vmatpush1.msra.mxu0 0.0
    %389 = vmatprep.subr.mxu0 0.0
    %390 = vmatpush1.msra.mxu0 0.0
    %391 = vmatprep.subr.mxu0 0.0
    %392 = vmatpush1.msra.mxu0 0.0
    %393 = vmatprep.subr.mxu0 0.0
    %394 = vmatpush1.msra.mxu0 0.0
    %395 = vmatprep.subr.mxu0 0.0
    %396 = vmatpush1.msra.mxu0 0.0
    %397 = vmatprep.subr.mxu0 0.0
    %398 = vmatpush1.msra.mxu0 0.0
    %399 = vmatprep.subr.mxu0 0.0
    %400 = vmatpush1.msra.mxu0 0.0
    %401 = vmatprep.subr.mxu0 0.0
    %402 = vmatpush1.msra.mxu0 0.0
    %403 = vmatprep.subr.mxu0 0.0
    %404 = vmatpush1.msra.mxu0 0.0
    %405 = vmatprep.subr.mxu0 0.0
    %406 = vmatpush1.msra.mxu0 0.0
    %407 = vmatprep.subr.mxu0 0.0
    %408 = vmatpush1.msra.mxu0 0.0
    %409 = vmatprep.subr.mxu0 0.0
    %410 = vmatpush1.msra.mxu0 0.0
    %411 = vmatprep.subr.mxu0 0.0
    %412 = vmatpush1.msra.mxu0 0.0
    %413 = vmatprep.subr.mxu0 0.0
    %414 = vmatpush1.msra.mxu0 0.0
    %415 = vmatprep.subr.mxu0 0.0
    %416 = vmatpush1.msra.mxu0 0.0
    %417 = vmatprep.subr.mxu0 0.0
    %418 = vmatpush1.msra.mxu0 0.0
    %419 = vmatprep.subr.mxu0 0.0
    %420 = vmatpush1.msra.mxu0 0.0
    %421 = vmatprep.subr.mxu0 0.0
    %422 = vmatpush1.msra.mxu0 0.0
    %423 = vmatprep.subr.mxu0 0.0
    %424 = vmatpush1.msra.mxu0 0.0
    %425 = vmatprep.subr.mxu0 0.0
    %426 = vmatpush1.msra.mxu0 0.0
    %427 = vmatprep.subr.mxu0 0.0
    %428 = vmatpush1.msra.mxu0 0.0
    %429 = vmatprep.subr.mxu0 0.0
    %430 = vmatpush1.msra.mxu0 0.0
    %431 = vmatprep.subr.mxu0 0.0
    %432 = vmatpush1.msra.mxu0 0.0
    %433 = vmatprep.subr.mxu0 0.0
    %434 = vmatpush1.msra.mxu0 0.0
    %435 = vmatprep.subr.mxu0 0.0
    %436 = vmatpush1.msra.mxu0 0.0
    %437 = vmatprep.subr.mxu0 0.0
    %438 = vmatpush1.msra.mxu0 0.0
    %439 = vmatprep.subr.mxu0 0.0
    %440 = vmatpush1.msra.mxu0 0.0
    %441 = vmatprep.subr.mxu0 0.0
    %442 = vmatpush1.msra.mxu0 0.0
    %443 = vmatprep.mubr.f32.mxu0 0.0
    %v444 = vand.u32 %v38, 4294901760
    %445 = vmatmul.mubr.f32.gmra.mrb[0].mxu0 %v444
    %v446 = vpop.f32.mrb[0].mxu0
    %v447 = vadd.f32 %v364, %v446
    %v448 = vpop.f32.mrb[0].mxu0
    %449 = vdwg.mxu0
    %450 = vmatprep.subr.mxu0 0.0
    %v451 = vand.u32 %v25, 4294901760
    %452 = vmatpush1.msra.mxu0 %v451
    %453 = vmatprep.subr.mxu0 0.0
    %v454 = vand.u32 %v26, 4294901760
    %455 = vmatpush1.msra.mxu0 %v454
    %456 = vmatprep.subr.mxu0 0.0
    %v457 = vand.u32 %v27, 4294901760
    %458 = vmatpush1.msra.mxu0 %v457
    %459 = vmatprep.subr.mxu0 0.0
    %v460 = vand.u32 %v28, 4294901760
    %461 = vmatpush1.msra.mxu0 %v460
    %462 = vmatprep.subr.mxu0 0.0
    %463 = vmatpush1.msra.mxu0 0.0
    %464 = vmatprep.subr.mxu0 0.0
    %465 = vmatpush1.msra.mxu0 0.0
    %466 = vmatprep.subr.mxu0 0.0
    %467 = vmatpush1.msra.mxu0 0.0
    %468 = vmatprep.subr.mxu0 0.0
    %469 = vmatpush1.msra.mxu0 0.0
    %470 = vmatprep.subr.mxu0 0.0
    %471 = vmatpush1.msra.mxu0 0.0
    %472 = vmatprep.subr.mxu0 0.0
    %473 = vmatpush1.msra.mxu0 0.0
    %474 = vmatprep.subr.mxu0 0.0
    %475 = vmatpush1.msra.mxu0 0.0
    %476 = vmatprep.subr.mxu0 0.0
    %477 = vmatpush1.msra.mxu0 0.0
    %478 = vmatprep.subr.mxu0 0.0
    %479 = vmatpush1.msra.mxu0 0.0
    %480 = vmatprep.subr.mxu0 0.0
    %481 = vmatpush1.msra.mxu0 0.0
    %482 = vmatprep.subr.mxu0 0.0
    %483 = vmatpush1.msra.mxu0 0.0
    %484 = vmatprep.subr.mxu0 0.0
    %485 = vmatpush1.msra.mxu0 0.0
    %486 = vmatprep.subr.mxu0 0.0
    %487 = vmatpush1.msra.mxu0 0.0
    %488 = vmatprep.subr.mxu0 0.0
    %489 = vmatpush1.msra.mxu0 0.0
    %490 = vmatprep.subr.mxu0 0.0
    %491 = vmatpush1.msra.mxu0 0.0
    %492 = vmatprep.subr.mxu0 0.0
    %493 = vmatpush1.msra.mxu0 0.0
    %494 = vmatprep.subr.mxu0 0.0
    %495 = vmatpush1.msra.mxu0 0.0
    %496 = vmatprep.subr.mxu0 0.0
    %497 = vmatpush1.msra.mxu0 0.0
    %498 = vmatprep.subr.mxu0 0.0
    %499 = vmatpush1.msra.mxu0 0.0
    %500 = vmatprep.subr.mxu0 0.0
    %501 = vmatpush1.msra.mxu0 0.0
    %502 = vmatprep.subr.mxu0 0.0
    %503 = vmatpush1.msra.mxu0 0.0
    %504 = vmatprep.subr.mxu0 0.0
    %505 = vmatpush1.msra.mxu0 0.0
    %506 = vmatprep.subr.mxu0 0.0
    %507 = vmatpush1.msra.mxu0 0.0
    %508 = vmatprep.subr.mxu0 0.0
    %509 = vmatpush1.msra.mxu0 0.0
    %510 = vmatprep.subr.mxu0 0.0
    %511 = vmatpush1.msra.mxu0 0.0
    %512 = vmatprep.subr.mxu0 0.0
    %513 = vmatpush1.msra.mxu0 0.0
    %514 = vmatprep.subr.mxu0 0.0
    %515 = vmatpush1.msra.mxu0 0.0
    %516 = vmatprep.subr.mxu0 0.0
    %517 = vmatpush1.msra.mxu0 0.0
    %518 = vmatprep.mubr.f32.mxu0 0.0
    %v519 = vand.u32 %v38, 4294901760
    %520 = vmatmul.mubr.f32.gmra.mrb[0].mxu0 %v519
    %v521 = vpop.f32.mrb[0].mxu0
    %v522 = vadd.f32 %v447, %v521
    %v523 = vpop.f32.mrb[0].mxu0
    %524 = vdwg.mxu0
    %v525 = vld [vmem:[%s3] sm:$0xff]
    %v526 = vld [vmem:[%s3 + $0x8] sm:$0xff]
    %v527 = vld [vmem:[%s3 + $0x10] sm:$0xff]
    %v528 = vld [vmem:[%s3 + $0x18] sm:$0xff]
    %v529 = vld [vmem:[%s4] sm:$0x1]
    %v531 = vlaneseq
    %v532 = vshrl.u32 %v531, 7
    %v533 = vsub.s32 0, %v532
    %v534 = vrot.slane %v529, %v533
    %536 = vmatprep.subr.mxu0 0.0
    %v537 = vand.u32 %v525, 4294901760
    %538 = vmatpush1.msra.mxu0 %v537
    %539 = vmatprep.subr.mxu0 0.0
    %v540 = vand.u32 %v526, 4294901760
    %541 = vmatpush1.msra.mxu0 %v540
    %542 = vmatprep.subr.mxu0 0.0
    %v543 = vand.u32 %v527, 4294901760
    %544 = vmatpush1.msra.mxu0 %v543
    %545 = vmatprep.subr.mxu0 0.0
    %v546 = vand.u32 %v528, 4294901760
    %547 = vmatpush1.msra.mxu0 %v546
    %548 = vmatprep.subr.mxu0 0.0
    %549 = vmatpush1.msra.mxu0 0.0
    %550 = vmatprep.subr.mxu0 0.0
    %551 = vmatpush1.msra.mxu0 0.0
    %552 = vmatprep.subr.mxu0 0.0
    %553 = vmatpush1.msra.mxu0 0.0
    %554 = vmatprep.subr.mxu0 0.0
    %555 = vmatpush1.msra.mxu0 0.0
    %556 = vmatprep.subr.mxu0 0.0
    %557 = vmatpush1.msra.mxu0 0.0
    %558 = vmatprep.subr.mxu0 0.0
    %559 = vmatpush1.msra.mxu0 0.0
    %560 = vmatprep.subr.mxu0 0.0
    %561 = vmatpush1.msra.mxu0 0.0
    %562 = vmatprep.subr.mxu0 0.0
    %563 = vmatpush1.msra.mxu0 0.0
    %564 = vmatprep.subr.mxu0 0.0
    %565 = vmatpush1.msra.mxu0 0.0
    %566 = vmatprep.subr.mxu0 0.0
    %567 = vmatpush1.msra.mxu0 0.0
    %568 = vmatprep.subr.mxu0 0.0
    %569 = vmatpush1.msra.mxu0 0.0
    %570 = vmatprep.subr.mxu0 0.0
    %571 = vmatpush1.msra.mxu0 0.0
    %572 = vmatprep.subr.mxu0 0.0
    %573 = vmatpush1.msra.mxu0 0.0
    %574 = vmatprep.subr.mxu0 0.0
    %575 = vmatpush1.msra.mxu0 0.0
    %576 = vmatprep.subr.mxu0 0.0
    %577 = vmatpush1.msra.mxu0 0.0
    %578 = vmatprep.subr.mxu0 0.0
    %579 = vmatpush1.msra.mxu0 0.0
    %580 = vmatprep.subr.mxu0 0.0
    %581 = vmatpush1.msra.mxu0 0.0
    %582 = vmatprep.subr.mxu0 0.0
    %583 = vmatpush1.msra.mxu0 0.0
    %584 = vmatprep.subr.mxu0 0.0
    %585 = vmatpush1.msra.mxu0 0.0
    %586 = vmatprep.subr.mxu0 0.0
    %587 = vmatpush1.msra.mxu0 0.0
    %588 = vmatprep.subr.mxu0 0.0
    %589 = vmatpush1.msra.mxu0 0.0
    %590 = vmatprep.subr.mxu0 0.0
    %591 = vmatpush1.msra.mxu0 0.0
    %592 = vmatprep.subr.mxu0 0.0
    %593 = vmatpush1.msra.mxu0 0.0
    %594 = vmatprep.subr.mxu0 0.0
    %595 = vmatpush1.msra.mxu0 0.0
    %596 = vmatprep.subr.mxu0 0.0
    %597 = vmatpush1.msra.mxu0 0.0
    %598 = vmatprep.subr.mxu0 0.0
    %599 = vmatpush1.msra.mxu0 0.0
    %600 = vmatprep.subr.mxu0 0.0
    %601 = vmatpush1.msra.mxu0 0.0
    %602 = vmatprep.subr.mxu0 0.0
    %603 = vmatpush1.msra.mxu0 0.0
    %604 = vmatprep.mubr.f32.mxu0 0.0
    %v605 = vand.u32 %v38, 4294901760
    %v606 = vsub.f32 %v38, %v605
    %v607 = vand.u32 %v606, 4294901760
    %v608 = vsub.f32 %v606, %v607
    %v609 = vand.u32 %v608, 4294901760
    %610 = vmatmul.mubr.f32.gmra.mrb[0].mxu0 %v609
    %v611 = vpop.f32.mrb[0].mxu0
    %v612 = vadd.f32 %v534, %v611
    %v613 = vpop.f32.mrb[0].mxu0
    %614 = vdwg.mxu0
    %615 = vmatprep.subr.mxu0 0.0
    %v616 = vand.u32 %v525, 4294901760
    %v617 = vsub.f32 %v525, %v616
    %v618 = vand.u32 %v617, 4294901760
    %v619 = vsub.f32 %v617, %v618
    %v620 = vand.u32 %v619, 4294901760
    %621 = vmatpush1.msra.mxu0 %v620
    %622 = vmatprep.subr.mxu0 0.0
    %v623 = vand.u32 %v526, 4294901760
    %v624 = vsub.f32 %v526, %v623
    %v625 = vand.u32 %v624, 4294901760
    %v626 = vsub.f32 %v624, %v625
    %v627 = vand.u32 %v626, 4294901760
    %628 = vmatpush1.msra.mxu0 %v627
    %629 = vmatprep.subr.mxu0 0.0
    %v630 = vand.u32 %v527, 4294901760
    %v631 = vsub.f32 %v527, %v630
    %v632 = vand.u32 %v631, 4294901760
    %v633 = vsub.f32 %v631, %v632
    %v634 = vand.u32 %v633, 4294901760
    %635 = vmatpush1.msra.mxu0 %v634
    %636 = vmatprep.subr.mxu0 0.0
    %v637 = vand.u32 %v528, 4294901760
    %v638 = vsub.f32 %v528, %v637
    %v639 = vand.u32 %v638, 4294901760
    %v640 = vsub.f32 %v638, %v639
    %v641 = vand.u32 %v640, 4294901760
    %642 = vmatpush1.msra.mxu0 %v641
    %643 = vmatprep.subr.mxu0 0.0
    %644 = vmatpush1.msra.mxu0 0.0
    %645 = vmatprep.subr.mxu0 0.0
    %646 = vmatpush1.msra.mxu0 0.0
    %647 = vmatprep.subr.mxu0 0.0
    %648 = vmatpush1.msra.mxu0 0.0
    %649 = vmatprep.subr.mxu0 0.0
    %650 = vmatpush1.msra.mxu0 0.0
    %651 = vmatprep.subr.mxu0 0.0
    %652 = vmatpush1.msra.mxu0 0.0
    %653 = vmatprep.subr.mxu0 0.0
    %654 = vmatpush1.msra.mxu0 0.0
    %655 = vmatprep.subr.mxu0 0.0
    %656 = vmatpush1.msra.mxu0 0.0
    %657 = vmatprep.subr.mxu0 0.0
    %658 = vmatpush1.msra.mxu0 0.0
    %659 = vmatprep.subr.mxu0 0.0
    %660 = vmatpush1.msra.mxu0 0.0
    %661 = vmatprep.subr.mxu0 0.0
    %662 = vmatpush1.msra.mxu0 0.0
    %663 = vmatprep.subr.mxu0 0.0
    %664 = vmatpush1.msra.mxu0 0.0
    %665 = vmatprep.subr.mxu0 0.0
    %666 = vmatpush1.msra.mxu0 0.0
    %667 = vmatprep.subr.mxu0 0.0
    %668 = vmatpush1.msra.mxu0 0.0
    %669 = vmatprep.subr.mxu0 0.0
    %670 = vmatpush1.msra.mxu0 0.0
    %671 = vmatprep.subr.mxu0 0.0
    %672 = vmatpush1.msra.mxu0 0.0
    %673 = vmatprep.subr.mxu0 0.0
    %674 = vmatpush1.msra.mxu0 0.0
    %675 = vmatprep.subr.mxu0 0.0
    %676 = vmatpush1.msra.mxu0 0.0
    %677 = vmatprep.subr.mxu0 0.0
    %678 = vmatpush1.msra.mxu0 0.0
    %679 = vmatprep.subr.mxu0 0.0
    %680 = vmatpush1.msra.mxu0 0.0
    %681 = vmatprep.subr.mxu0 0.0
    %682 = vmatpush1.msra.mxu0 0.0
    %683 = vmatprep.subr.mxu0 0.0
    %684 = vmatpush1.msra.mxu0 0.0
    %685 = vmatprep.subr.mxu0 0.0
    %686 = vmatpush1.msra.mxu0 0.0
    %687 = vmatprep.subr.mxu0 0.0
    %688 = vmatpush1.msra.mxu0 0.0
    %689 = vmatprep.subr.mxu0 0.0
    %690 = vmatpush1.msra.mxu0 0.0
    %691 = vmatprep.subr.mxu0 0.0
    %692 = vmatpush1.msra.mxu0 0.0
    %693 = vmatprep.subr.mxu0 0.0
    %694 = vmatpush1.msra.mxu0 0.0
    %695 = vmatprep.subr.mxu0 0.0
    %696 = vmatpush1.msra.mxu0 0.0
    %697 = vmatprep.subr.mxu0 0.0
    %698 = vmatpush1.msra.mxu0 0.0
    %699 = vmatprep.mubr.f32.mxu0 0.0
    %v700 = vand.u32 %v38, 4294901760
    %701 = vmatmul.mubr.f32.gmra.mrb[0].mxu0 %v700
    %v702 = vpop.f32.mrb[0].mxu0
    %v703 = vadd.f32 %v612, %v702
    %v704 = vpop.f32.mrb[0].mxu0
    %705 = vdwg.mxu0
    %706 = vmatprep.subr.mxu0 0.0
    %v707 = vand.u32 %v525, 4294901760
    %v708 = vsub.f32 %v525, %v707
    %709 = vmatpush1.msra.mxu0 %v708
    %710 = vmatprep.subr.mxu0 0.0
    %v711 = vand.u32 %v526, 4294901760
    %v712 = vsub.f32 %v526, %v711
    %713 = vmatpush1.msra.mxu0 %v712
    %714 = vmatprep.subr.mxu0 0.0
    %v715 = vand.u32 %v527, 4294901760
    %v716 = vsub.f32 %v527, %v715
    %717 = vmatpush1.msra.mxu0 %v716
    %718 = vmatprep.subr.mxu0 0.0
    %v719 = vand.u32 %v528, 4294901760
    %v720 = vsub.f32 %v528, %v719
    %721 = vmatpush1.msra.mxu0 %v720
    %722 = vmatprep.subr.mxu0 0.0
    %723 = vmatpush1.msra.mxu0 0.0
    %724 = vmatprep.subr.mxu0 0.0
    %725 = vmatpush1.msra.mxu0 0.0
    %726 = vmatprep.subr.mxu0 0.0
    %727 = vmatpush1.msra.mxu0 0.0
    %728 = vmatprep.subr.mxu0 0.0
    %729 = vmatpush1.msra.mxu0 0.0
    %730 = vmatprep.subr.mxu0 0.0
    %731 = vmatpush1.msra.mxu0 0.0
    %732 = vmatprep.subr.mxu0 0.0
    %733 = vmatpush1.msra.mxu0 0.0
    %734 = vmatprep.subr.mxu0 0.0
    %735 = vmatpush1.msra.mxu0 0.0
    %736 = vmatprep.subr.mxu0 0.0
    %737 = vmatpush1.msra.mxu0 0.0
    %738 = vmatprep.subr.mxu0 0.0
    %739 = vmatpush1.msra.mxu0 0.0
    %740 = vmatprep.subr.mxu0 0.0
    %741 = vmatpush1.msra.mxu0 0.0
    %742 = vmatprep.subr.mxu0 0.0
    %743 = vmatpush1.msra.mxu0 0.0
    %744 = vmatprep.subr.mxu0 0.0
    %745 = vmatpush1.msra.mxu0 0.0
    %746 = vmatprep.subr.mxu0 0.0
    %747 = vmatpush1.msra.mxu0 0.0
    %748 = vmatprep.subr.mxu0 0.0
    %749 = vmatpush1.msra.mxu0 0.0
    %750 = vmatprep.subr.mxu0 0.0
    %751 = vmatpush1.msra.mxu0 0.0
    %752 = vmatprep.subr.mxu0 0.0
    %753 = vmatpush1.msra.mxu0 0.0
    %754 = vmatprep.subr.mxu0 0.0
    %755 = vmatpush1.msra.mxu0 0.0
    %756 = vmatprep.subr.mxu0 0.0
    %757 = vmatpush1.msra.mxu0 0.0
    %758 = vmatprep.subr.mxu0 0.0
    %759 = vmatpush1.msra.mxu0 0.0
    %760 = vmatprep.subr.mxu0 0.0
    %761 = vmatpush1.msra.mxu0 0.0
    %762 = vmatprep.subr.mxu0 0.0
    %763 = vmatpush1.msra.mxu0 0.0
    %764 = vmatprep.subr.mxu0 0.0
    %765 = vmatpush1.msra.mxu0 0.0
    %766 = vmatprep.subr.mxu0 0.0
    %767 = vmatpush1.msra.mxu0 0.0
    %768 = vmatprep.subr.mxu0 0.0
    %769 = vmatpush1.msra.mxu0 0.0
    %770 = vmatprep.subr.mxu0 0.0
    %771 = vmatpush1.msra.mxu0 0.0
    %772 = vmatprep.subr.mxu0 0.0
    %773 = vmatpush1.msra.mxu0 0.0
    %774 = vmatprep.subr.mxu0 0.0
    %775 = vmatpush1.msra.mxu0 0.0
    %776 = vmatprep.subr.mxu0 0.0
    %777 = vmatpush1.msra.mxu0 0.0
    %778 = vmatprep.mubr.f32.mxu0 0.0
    %v779 = vand.u32 %v38, 4294901760
    %v780 = vsub.f32 %v38, %v779
    %781 = vmatmul.mubr.f32.gmra.mrb[0].mxu0 %v780
    %v782 = vpop.f32.mrb[0].mxu0
    %v783 = vadd.f32 %v703, %v782
    %v784 = vpop.f32.mrb[0].mxu0
    %785 = vdwg.mxu0
    %786 = vmatprep.subr.mxu0 0.0
    %v787 = vand.u32 %v525, 4294901760
    %788 = vmatpush1.msra.mxu0 %v787
    %789 = vmatprep.subr.mxu0 0.0
    %v790 = vand.u32 %v526, 4294901760
    %791 = vmatpush1.msra.mxu0 %v790
    %792 = vmatprep.subr.mxu0 0.0
    %v793 = vand.u32 %v527, 4294901760
    %794 = vmatpush1.msra.mxu0 %v793
    %795 = vmatprep.subr.mxu0 0.0
    %v796 = vand.u32 %v528, 4294901760
    %797 = vmatpush1.msra.mxu0 %v796
    %798 = vmatprep.subr.mxu0 0.0
    %799 = vmatpush1.msra.mxu0 0.0
    %800 = vmatprep.subr.mxu0 0.0
    %801 = vmatpush1.msra.mxu0 0.0
    %802 = vmatprep.subr.mxu0 0.0
    %803 = vmatpush1.msra.mxu0 0.0
    %804 = vmatprep.subr.mxu0 0.0
    %805 = vmatpush1.msra.mxu0 0.0
    %806 = vmatprep.subr.mxu0 0.0
    %807 = vmatpush1.msra.mxu0 0.0
    %808 = vmatprep.subr.mxu0 0.0
    %809 = vmatpush1.msra.mxu0 0.0
    %810 = vmatprep.subr.mxu0 0.0
    %811 = vmatpush1.msra.mxu0 0.0
    %812 = vmatprep.subr.mxu0 0.0
    %813 = vmatpush1.msra.mxu0 0.0
    %814 = vmatprep.subr.mxu0 0.0
    %815 = vmatpush1.msra.mxu0 0.0
    %816 = vmatprep.subr.mxu0 0.0
    %817 = vmatpush1.msra.mxu0 0.0
    %818 = vmatprep.subr.mxu0 0.0
    %819 = vmatpush1.msra.mxu0 0.0
    %820 = vmatprep.subr.mxu0 0.0
    %821 = vmatpush1.msra.mxu0 0.0
    %822 = vmatprep.subr.mxu0 0.0
    %823 = vmatpush1.msra.mxu0 0.0
    %824 = vmatprep.subr.mxu0 0.0
    %825 = vmatpush1.msra.mxu0 0.0
    %826 = vmatprep.subr.mxu0 0.0
    %827 = vmatpush1.msra.mxu0 0.0
    %828 = vmatprep.subr.mxu0 0.0
    %829 = vmatpush1.msra.mxu0 0.0
    %830 = vmatprep.subr.mxu0 0.0
    %831 = vmatpush1.msra.mxu0 0.0
    %832 = vmatprep.subr.mxu0 0.0
    %833 = vmatpush1.msra.mxu0 0.0
    %834 = vmatprep.subr.mxu0 0.0
    %835 = vmatpush1.msra.mxu0 0.0
    %836 = vmatprep.subr.mxu0 0.0
    %837 = vmatpush1.msra.mxu0 0.0
    %838 = vmatprep.subr.mxu0 0.0
    %839 = vmatpush1.msra.mxu0 0.0
    %840 = vmatprep.subr.mxu0 0.0
    %841 = vmatpush1.msra.mxu0 0.0
    %842 = vmatprep.subr.mxu0 0.0
    %843 = vmatpush1.msra.mxu0 0.0
    %844 = vmatprep.subr.mxu0 0.0
    %845 = vmatpush1.msra.mxu0 0.0
    %846 = vmatprep.subr.mxu0 0.0
    %847 = vmatpush1.msra.mxu0 0.0
    %848 = vmatprep.subr.mxu0 0.0
    %849 = vmatpush1.msra.mxu0 0.0
    %850 = vmatprep.subr.mxu0 0.0
    %851 = vmatpush1.msra.mxu0 0.0
    %852 = vmatprep.subr.mxu0 0.0
    %853 = vmatpush1.msra.mxu0 0.0
    %854 = vmatprep.mubr.f32.mxu0 0.0
    %v855 = vand.u32 %v38, 4294901760
    %v856 = vsub.f32 %v38, %v855
    %v857 = vand.u32 %v856, 4294901760
    %858 = vmatmul.mubr.f32.gmra.mrb[0].mxu0 %v857
    %v859 = vpop.f32.mrb[0].mxu0
    %v860 = vadd.f32 %v783, %v859
    %v861 = vpop.f32.mrb[0].mxu0
    %862 = vdwg.mxu0
    %863 = vmatprep.subr.mxu0 0.0
    %v864 = vand.u32 %v525, 4294901760
    %v865 = vsub.f32 %v525, %v864
    %v866 = vand.u32 %v865, 4294901760
    %867 = vmatpush1.msra.mxu0 %v866
    %868 = vmatprep.subr.mxu0 0.0
    %v869 = vand.u32 %v526, 4294901760
    %v870 = vsub.f32 %v526, %v869
    %v871 = vand.u32 %v870, 4294901760
    %872 = vmatpush1.msra.mxu0 %v871
    %873 = vmatprep.subr.mxu0 0.0
    %v874 = vand.u32 %v527, 4294901760
    %v875 = vsub.f32 %v527, %v874
    %v876 = vand.u32 %v875, 4294901760
    %877 = vmatpush1.msra.mxu0 %v876
    %878 = vmatprep.subr.mxu0 0.0
    %v879 = vand.u32 %v528, 4294901760
    %v880 = vsub.f32 %v528, %v879
    %v881 = vand.u32 %v880, 4294901760
    %882 = vmatpush1.msra.mxu0 %v881
    %883 = vmatprep.subr.mxu0 0.0
    %884 = vmatpush1.msra.mxu0 0.0
    %885 = vmatprep.subr.mxu0 0.0
    %886 = vmatpush1.msra.mxu0 0.0
    %887 = vmatprep.subr.mxu0 0.0
    %888 = vmatpush1.msra.mxu0 0.0
    %889 = vmatprep.subr.mxu0 0.0
    %890 = vmatpush1.msra.mxu0 0.0
    %891 = vmatprep.subr.mxu0 0.0
    %892 = vmatpush1.msra.mxu0 0.0
    %893 = vmatprep.subr.mxu0 0.0
    %894 = vmatpush1.msra.mxu0 0.0
    %895 = vmatprep.subr.mxu0 0.0
    %896 = vmatpush1.msra.mxu0 0.0
    %897 = vmatprep.subr.mxu0 0.0
    %898 = vmatpush1.msra.mxu0 0.0
    %899 = vmatprep.subr.mxu0 0.0
    %900 = vmatpush1.msra.mxu0 0.0
    %901 = vmatprep.subr.mxu0 0.0
    %902 = vmatpush1.msra.mxu0 0.0
    %903 = vmatprep.subr.mxu0 0.0
    %904 = vmatpush1.msra.mxu0 0.0
    %905 = vmatprep.subr.mxu0 0.0
    %906 = vmatpush1.msra.mxu0 0.0
    %907 = vmatprep.subr.mxu0 0.0
    %908 = vmatpush1.msra.mxu0 0.0
    %909 = vmatprep.subr.mxu0 0.0
    %910 = vmatpush1.msra.mxu0 0.0
    %911 = vmatprep.subr.mxu0 0.0
    %912 = vmatpush1.msra.mxu0 0.0
    %913 = vmatprep.subr.mxu0 0.0
    %914 = vmatpush1.msra.mxu0 0.0
    %915 = vmatprep.subr.mxu0 0.0
    %916 = vmatpush1.msra.mxu0 0.0
    %917 = vmatprep.subr.mxu0 0.0
    %918 = vmatpush1.msra.mxu0 0.0
    %919 = vmatprep.subr.mxu0 0.0
    %920 = vmatpush1.msra.mxu0 0.0
    %921 = vmatprep.subr.mxu0 0.0
    %922 = vmatpush1.msra.mxu0 0.0
    %923 = vmatprep.subr.mxu0 0.0
    %924 = vmatpush1.msra.mxu0 0.0
    %925 = vmatprep.subr.mxu0 0.0
    %926 = vmatpush1.msra.mxu0 0.0
    %927 = vmatprep.subr.mxu0 0.0
    %928 = vmatpush1.msra.mxu0 0.0
    %929 = vmatprep.subr.mxu0 0.0
    %930 = vmatpush1.msra.mxu0 0.0
    %931 = vmatprep.subr.mxu0 0.0
    %932 = vmatpush1.msra.mxu0 0.0
    %933 = vmatprep.subr.mxu0 0.0
    %934 = vmatpush1.msra.mxu0 0.0
    %935 = vmatprep.subr.mxu0 0.0
    %936 = vmatpush1.msra.mxu0 0.0
    %937 = vmatprep.subr.mxu0 0.0
    %938 = vmatpush1.msra.mxu0 0.0
    %939 = vmatprep.mubr.f32.mxu0 0.0
    %v940 = vand.u32 %v38, 4294901760
    %941 = vmatmul.mubr.f32.gmra.mrb[0].mxu0 %v940
    %v942 = vpop.f32.mrb[0].mxu0
    %v943 = vadd.f32 %v860, %v942
    %v944 = vpop.f32.mrb[0].mxu0
    %945 = vdwg.mxu0
    %946 = vmatprep.subr.mxu0 0.0
    %v947 = vand.u32 %v525, 4294901760
    %948 = vmatpush1.msra.mxu0 %v947
    %949 = vmatprep.subr.mxu0 0.0
    %v950 = vand.u32 %v526, 4294901760
    %951 = vmatpush1.msra.mxu0 %v950
    %952 = vmatprep.subr.mxu0 0.0
    %v953 = vand.u32 %v527, 4294901760
    %954 = vmatpush1.msra.mxu0 %v953
    %955 = vmatprep.subr.mxu0 0.0
    %v956 = vand.u32 %v528, 4294901760
    %957 = vmatpush1.msra.mxu0 %v956
    %958 = vmatprep.subr.mxu0 0.0
    %959 = vmatpush1.msra.mxu0 0.0
    %960 = vmatprep.subr.mxu0 0.0
    %961 = vmatpush1.msra.mxu0 0.0
    %962 = vmatprep.subr.mxu0 0.0
    %963 = vmatpush1.msra.mxu0 0.0
    %964 = vmatprep.subr.mxu0 0.0
    %965 = vmatpush1.msra.mxu0 0.0
    %966 = vmatprep.subr.mxu0 0.0
    %967 = vmatpush1.msra.mxu0 0.0
    %968 = vmatprep.subr.mxu0 0.0
    %969 = vmatpush1.msra.mxu0 0.0
    %970 = vmatprep.subr.mxu0 0.0
    %971 = vmatpush1.msra.mxu0 0.0
    %972 = vmatprep.subr.mxu0 0.0
    %973 = vmatpush1.msra.mxu0 0.0
    %974 = vmatprep.subr.mxu0 0.0
    %975 = vmatpush1.msra.mxu0 0.0
    %976 = vmatprep.subr.mxu0 0.0
    %977 = vmatpush1.msra.mxu0 0.0
    %978 = vmatprep.subr.mxu0 0.0
    %979 = vmatpush1.msra.mxu0 0.0
    %980 = vmatprep.subr.mxu0 0.0
    %981 = vmatpush1.msra.mxu0 0.0
    %982 = vmatprep.subr.mxu0 0.0
    %983 = vmatpush1.msra.mxu0 0.0
    %984 = vmatprep.subr.mxu0 0.0
    %985 = vmatpush1.msra.mxu0 0.0
    %986 = vmatprep.subr.mxu0 0.0
    %987 = vmatpush1.msra.mxu0 0.0
    %988 = vmatprep.subr.mxu0 0.0
    %989 = vmatpush1.msra.mxu0 0.0
    %990 = vmatprep.subr.mxu0 0.0
    %991 = vmatpush1.msra.mxu0 0.0
    %992 = vmatprep.subr.mxu0 0.0
    %993 = vmatpush1.msra.mxu0 0.0
    %994 = vmatprep.subr.mxu0 0.0
    %995 = vmatpush1.msra.mxu0 0.0
    %996 = vmatprep.subr.mxu0 0.0
    %997 = vmatpush1.msra.mxu0 0.0
    %998 = vmatprep.subr.mxu0 0.0
    %999 = vmatpush1.msra.mxu0 0.0
    %1000 = vmatprep.subr.mxu0 0.0
    %1001 = vmatpush1.msra.mxu0 0.0
    %1002 = vmatprep.subr.mxu0 0.0
    %1003 = vmatpush1.msra.mxu0 0.0
    %1004 = vmatprep.subr.mxu0 0.0
    %1005 = vmatpush1.msra.mxu0 0.0
    %1006 = vmatprep.subr.mxu0 0.0
    %1007 = vmatpush1.msra.mxu0 0.0
    %1008 = vmatprep.subr.mxu0 0.0
    %1009 = vmatpush1.msra.mxu0 0.0
    %1010 = vmatprep.subr.mxu0 0.0
    %1011 = vmatpush1.msra.mxu0 0.0
    %1012 = vmatprep.subr.mxu0 0.0
    %1013 = vmatpush1.msra.mxu0 0.0
    %1014 = vmatprep.mubr.f32.mxu0 0.0
    %v1015 = vand.u32 %v38, 4294901760
    %1016 = vmatmul.mubr.f32.gmra.mrb[0].mxu0 %v1015
    %v1017 = vpop.f32.mrb[0].mxu0
    %v1018 = vadd.f32 %v943, %v1017
    %v1019 = vpop.f32.mrb[0].mxu0
    %1020 = vdwg.mxu0
    %vm1021 = vcmp.gt.f32.partialorder %v1018, 20.0
    %v1022 = vmul.f32 %v1018, 1.442695
    %v1023 = vpow.pop %v1022
    %v1024 = vadd.f32 %v1023, 1.0
    %v1025 = vlog2.pop %v1024
    %v1026 = vmul.f32 %v1025, 0.6931472
    %v1027 = vmul.f32 -0.5, %v1023
    %v1028 = vadd.f32 %v1027, 1.0
    %v1029 = vmul.f32 %v1028, %v1023
    %v1030 = vand.u32 2147483647, %v1023
    %vm1031 = vcmp.lt.f32.partialorder %v1030, 0.0004427343
    %v1032 = vsel %vm1031, %v1029, %v1026
    %v1033 = vsel %vm1021, %v1018, %v1032
    %vm1034 = vcmask 130048
    %1035 = vst.msk [vmem:[#allocation2] sm:$0xff] %vm1034, %v522
    %1036 = vst.msk [vmem:[#allocation4] sm:$0xff] %vm1034, %v1033
    // Predicated region
    $region22: #{zparams_forward.1} parent=1 // pred_check
      _
    $region23: #{zparams_forward.1} parent=1 // pred_check_branch
      %1038 = sbr.rel (0) target = $region25
    $region24: #{zparams_forward.1} parent=1 // pred_region
      %s1040 = ssub.s32 128, 128
      %1041 = vsyncadd [#allocation3], %s1040
      %s1043 = sshll.u32 [#allocation2], 4
      %s1044 = int_to_ptr.vmem [resolvable:$true] %s1043
      %1046 = dma.vmem_to_hbm [thread:$0]  %s1044, 128, %s5, [#allocation3]
    $region25: #{zparams_forward.1} parent=1 // pred_fallthru
      _
    // Predicated region
    $region26: #{zparams_forward.1} parent=1 // pred_check
      _
    $region27: #{zparams_forward.1} parent=1 // pred_check_branch
      %1048 = sbr.rel (0) target = $region29
    $region28: #{zparams_forward.1} parent=1 // pred_region
      %s1050 = ssub.s32 128, 128
      %1051 = vsyncadd [#allocation5], %s1050
      %s1053 = sshll.u32 [#allocation4], 4
      %s1054 = int_to_ptr.vmem [resolvable:$true] %s1053
      %1056 = dma.vmem_to_hbm [thread:$0]  %s1054, 128, %s6, [#allocation5]
    $region29: #{zparams_forward.1} parent=1 // pred_fallthru
      _
    // Predicated region
    $region30: #{zparams_forward.1} parent=1 // pred_check
      _
    $region31: #{zparams_forward.1} parent=1 // pred_check_branch
      %1058 = sbr.rel (0) target = $region33
    $region32: #{zparams_forward.1} parent=1 // pred_region
      %1059 = dma.done [#allocation3], 128
    $region33: #{zparams_forward.1} parent=1 // pred_fallthru
      _
    // Predicated region
    $region34: #{zparams_forward.1} parent=1 // pred_check
      _
    $region35: #{zparams_forward.1} parent=1 // pred_check_branch
      %1061 = sbr.rel (0) target = $region37
    $region36: #{zparams_forward.1} parent=1 // pred_region
      %1062 = dma.done [#allocation5], 128
    $region37: #{zparams_forward.1} parent=1 // pred_fallthru
      _
    %1063 = vsyncpa [#allocation3], 1
    %1064 = vsyncpa [#allocation5], 1

</llo_original>
